<compile_context>
chip_gen: v7x
topology: tpu7x:2x2x1
jax: 0.10.0
libtpu: 0.0.40
codegen_flags: <defaults>
</compile_context>

<pallas_src>
import math
import functools

import jax
import jax.numpy as jnp
from jax.experimental import pallas as pl
from jax.experimental.pallas import tpu as pltpu

BN_EPS = 1e-5


# ---------------------------------------------------------------------------
# Pallas kernels
# ---------------------------------------------------------------------------
def _mm_bias_kernel(a_ref, w_ref, b_ref, o_ref, *, relu):
    """(tm,K)bf16 @ (K,tn)bf16 -> f32 acc, + folded-BN bias, optional ReLU."""
    acc = jnp.dot(a_ref[...], w_ref[...], preferred_element_type=jnp.float32)
    y = acc + b_ref[...]
    if relu:
        y = jnp.maximum(y, 0.0)
    o_ref[...] = y.astype(o_ref.dtype)


def _mm_bias_res_kernel(a_ref, w_ref, b_ref, r_ref, o_ref, *, relu):
    """Same as above but fuses the bottleneck residual add before the ReLU."""
    acc = jnp.dot(a_ref[...], w_ref[...], preferred_element_type=jnp.float32)
    y = acc + b_ref[...] + r_ref[...].astype(jnp.float32)
    if relu:
        y = jnp.maximum(y, 0.0)
    o_ref[...] = y.astype(o_ref.dtype)


def _conv3x3_kernel(x_ref, w_ref, b_ref, o_ref, *, Fp, Wp, relu):
    """3x3 / stride-1 / pad-1 conv as 9 shifted (Fp,Cin)@(Cin,tn) matmuls.

    x_ref : (1, Fp + 2*Wp + 2, Cin) bf16  zero-padded activation, flattened
            over (Hp, Wp), with Wp+1 guard rows in front (and matching back
            guard) so every tap slice is a static in-range offset.
    w_ref : (9, Cin, tn) bf16  BN-scale-folded weights, tap-major (kh, kw).
    b_ref : (1, tn) f32        folded BN bias.
    o_ref : (1, Fp, tn)        conv output on padded coordinates; the wrapper
                               crops the 1-pixel border afterwards.
    """
    acc = None
    for i in range(3):
        for j in range(3):
            a = x_ref[0, pl.ds(i * Wp + j, Fp), :]
            d = jnp.dot(a, w_ref[3 * i + j],
                        preferred_element_type=jnp.float32)
            acc = d if acc is None else acc + d
    y = acc + b_ref[...]
    if relu:
        y = jnp.maximum(y, 0.0)
    o_ref[0] = y.astype(o_ref.dtype)


def _maxpool_kernel(ee_ref, eo_ref, oe_ref, oo_ref, o_ref):
    """3x3 stride-2 max pool over four 2x2-parity planes (unit shifts only)."""
    Ho, Wo = o_ref.shape[1], o_ref.shape[2]

    def win(ref, dg, dh):
        return ref[0, pl.ds(dg, Ho), pl.ds(dh, Wo), :]

    m = win(ee_ref, 0, 0)
    for term in (win(eo_ref, 0, 0), win(ee_ref, 0, 1),
                 win(oe_ref, 0, 0), win(oo_ref, 0, 0), win(oe_ref, 0, 1),
                 win(ee_ref, 1, 0), win(eo_ref, 1, 0), win(ee_ref, 1, 1)):
        m = jnp.maximum(m, term)
    o_ref[0] = m


def _head_kernel(x_ref, w_ref, b_ref, o_ref, *, inv):
    """AvgPool2d(7) on 7x7 maps (== global spatial mean) fused with the fc."""
    pooled = jnp.sum(x_ref[...].astype(jnp.float32), axis=1) * inv       # (Np, C)
    logits = jnp.dot(pooled.astype(jnp.bfloat16), w_ref[...],
                     preferred_element_type=jnp.float32)
    o_ref[...] = logits + b_ref[...]


# ---------------------------------------------------------------------------
# Tiling helpers + Pallas wrappers
# ---------------------------------------------------------------------------
def _pick_tm(M, cap=512):
    """Largest divisor of M that is a multiple of 8 and <= cap (else full M)."""
    for d in range(min(M, cap), 7, -1):
        if M % d == 0 and d % 8 == 0:
            return d
    return M


def _pick_tn(Cout):
    if Cout >= 512 and Cout % 256 == 0:
        return 256      # feeds the 256-wide MXU (v6e/v7x); >=2 parallel blocks
    if Cout >= 256 and Cout % 128 == 0:
        return 128      # two parallel blocks for megacore, 128-lane dense
    return Cout


def matmul_bias_act(A, W, bias, residual, relu):
    """A:(M,K)bf16  W:(K,Cout)bf16  bias:(1,Cout)f32  residual:(M,Cout)bf16|None."""
    M, K = A.shape
    Cout = W.shape[1]
    tm = _pick_tm(M)
    tn = _pick_tn(Cout)
    assert M % tm == 0 and Cout % tn == 0

    in_specs = [
        pl.BlockSpec((tm, K), lambda i, j: (i, 0)),      # activations, full K
        pl.BlockSpec((K, tn), lambda i, j: (0, j)),      # weights, full-K resident
        pl.BlockSpec((1, tn), lambda i, j: (0, j)),      # folded BN bias
    ]
    args = [A, W, bias]
    if residual is not None:
        in_specs.append(pl.BlockSpec((tm, tn), lambda i, j: (i, j)))
        args.append(residual)
        kernel = functools.partial(_mm_bias_res_kernel, relu=relu)
    else:
        kernel = functools.partial(_mm_bias_kernel, relu=relu)

    return pl.pallas_call(
        kernel,
        out_shape=jax.ShapeDtypeStruct((M, Cout), jnp.bfloat16),
        grid=(M // tm, Cout // tn),
        in_specs=in_specs,
        out_specs=pl.BlockSpec((tm, tn), lambda i, j: (i, j)),
        compiler_params=pltpu.CompilerParams(
            dimension_semantics=("parallel", "parallel")),
    )(*args)


def conv3x3_bn(x, cp, relu=True):
    """3x3/s1/p1 conv + folded BN (+ReLU) without HBM im2col. x: (N,H,W,Cin) bf16."""
    N, H, W, Cin = x.shape
    Hp, Wp = H + 2, W + 2
    F = Hp * Wp
    Fp = ((F + 7) // 8) * 8
    Cout = cp["w"].shape[2]
    tn = _pick_tn(Cout)

    xp = jnp.pad(x, ((0, 0), (1, 1), (1, 1), (0, 0)))               # conv zero pad
    xf = xp.reshape(N, F, Cin)
    xf = jnp.pad(xf, ((0, 0), (Wp + 1, Wp + 1 + (Fp - F)), (0, 0)))  # guard rows
    rows = Fp + 2 * Wp + 2

    out = pl.pallas_call(
        functools.partial(_conv3x3_kernel, Fp=Fp, Wp=Wp, relu=relu),
        out_shape=jax.ShapeDtypeStruct((N, Fp, Cout), jnp.bfloat16),
        grid=(N, Cout // tn),
        in_specs=[
            pl.BlockSpec((1, rows, Cin), lambda n, j: (n, 0, 0)),
            pl.BlockSpec((9, Cin, tn), lambda n, j: (0, 0, j)),
            pl.BlockSpec((1, tn), lambda n, j: (0, j)),
        ],
        out_specs=pl.BlockSpec((1, Fp, tn), lambda n, j: (n, 0, j)),
        compiler_params=pltpu.CompilerParams(
            dimension_semantics=("parallel", "parallel")),
    )(xf, cp["w"], cp["bias"])

    return out[:, :F, :].reshape(N, Hp, Wp, Cout)[:, 1:1 + H, 1:1 + W, :]


def maxpool_3x3_s2_ceil(x):
    """nn.MaxPool2d(kernel_size=3, stride=2, padding=0, ceil_mode=True), NHWC."""
    N, H, W, C = x.shape
    Ho = -(-(H - 3) // 2) + 1
    Wo = -(-(W - 3) // 2) + 1
    Hp, Wp = 2 * Ho + 2, 2 * Wo + 2             # even extent covering the window reach
    xp = jnp.pad(x, ((0, 0), (0, Hp - H), (0, Wp - W), (0, 0)),
                 constant_values=-jnp.inf)
    # 2x2 parity planes: total volume == padded input, each read exactly once.
    ee = xp[:, 0::2, 0::2, :]
    eo = xp[:, 0::2, 1::2, :]
    oe = xp[:, 1::2, 0::2, :]
    oo = xp[:, 1::2, 1::2, :]
    Gh, Gw = Ho + 1, Wo + 1
    return pl.pallas_call(
        _maxpool_kernel,
        out_shape=jax.ShapeDtypeStruct((N, Ho, Wo, C), x.dtype),
        grid=(N,),
        in_specs=[pl.BlockSpec((1, Gh, Gw, C), lambda n: (n, 0, 0, 0))] * 4,
        out_specs=pl.BlockSpec((1, Ho, Wo, C), lambda n: (n, 0, 0, 0)),
        compiler_params=pltpu.CompilerParams(dimension_semantics=("parallel",)),
    )(ee, eo, oe, oo)


def _im2col(x, k, stride, pad):
    """x: (N,H,W,C) -> (N,Ho,Wo,k*k*C) patches, tap order (kh, kw, cin).  Stem only."""
    N, H, W, C = x.shape
    xp = jnp.pad(x, ((0, 0), (pad, pad), (pad, pad), (0, 0)))
    Ho = (H + 2 * pad - k) // stride + 1
    Wo = (W + 2 * pad - k) // stride + 1
    cols = []
    for i in range(k):
        for j in range(k):
            cols.append(xp[:, i:i + stride * (Ho - 1) + 1:stride,
                           j:j + stride * (Wo - 1) + 1:stride, :])
    return jnp.concatenate(cols, axis=-1), Ho, Wo


def stem_fwd(x, cp):
    """conv 7x7 / stride 2 / pad 3 + BN + ReLU."""
    patches, Ho, Wo = _im2col(x, cp["k"], cp["stride"], cp["pad"])
    N = x.shape[0]
    A = patches.reshape(N * Ho * Wo, -1)
    out = matmul_bias_act(A, cp["w"], cp["bias"], None, relu=True)
    return out.reshape(N, Ho, Wo, -1)


def head_fwd(x, fc):
    """avgpool(7) -> flatten -> fc, fused into one kernel."""
    N, H, W, C = x.shape
    xf = x.reshape(N, H * W, C)
    Np = max(8, ((N + 7) // 8) * 8)              # aligned matmul M dim
    if Np != N:
        xf = jnp.pad(xf, ((0, Np - N), (0, 0), (0, 0)))
    ncp = fc["w"].shape[1]                       # num_classes padded to 128-multiple
    tn = 512 if ncp % 512 == 0 else ncp
    out = pl.pallas_call(
        functools.partial(_head_kernel, inv=1.0 / (H * W)),
        out_shape=jax.ShapeDtypeStruct((Np, ncp), jnp.float32),
        grid=(ncp // tn,),
        in_specs=[
            pl.BlockSpec((Np, H * W, C), lambda j: (0, 0, 0)),
            pl.BlockSpec((C, tn), lambda j: (0, j)),
            pl.BlockSpec((1, tn), lambda j: (0, j)),
        ],
        out_specs=pl.BlockSpec((Np, tn), lambda j: (0, j)),
        compiler_params=pltpu.CompilerParams(dimension_semantics=("parallel",)),
    )(xf, fc["w"], fc["b"])
    return out[:N, :fc["num_classes"]]


# ---------------------------------------------------------------------------
# Parameter construction (deterministic, mirrors ResNet.__init__ init scheme)
# ---------------------------------------------------------------------------
def _bn_fold(cout):
    # BN per the module's init loop (weight=1, bias=0) with frozen running
    # stats (mean=0, var=1).
    gamma = jnp.ones((cout,), jnp.float32)
    beta = jnp.zeros((cout,), jnp.float32)
    mean = jnp.zeros((cout,), jnp.float32)
    var = jnp.ones((cout,), jnp.float32)
    scale = gamma / jnp.sqrt(var + BN_EPS)
    bias = beta - mean * scale
    return scale, bias


def _conv_mat_params(key, cin, cout, k, stride, pad):
    n = k * k * cout
    w = jax.random.normal(key, (cout, cin, k, k), jnp.float32) * math.sqrt(2.0 / n)
    scale, bias = _bn_fold(cout)
    w_hwio = jnp.transpose(w, (2, 3, 1, 0)).reshape(k * k * cin, cout)
    return {"w": (w_hwio * scale[None, :]).astype(jnp.bfloat16),   # BN scale folded in
            "bias": bias.reshape(1, cout),
            "k": k, "stride": stride, "pad": pad}


def _conv_tap_params(key, cin, cout):
    n = 3 * 3 * cout
    w = jax.random.normal(key, (cout, cin, 3, 3), jnp.float32) * math.sqrt(2.0 / n)
    scale, bias = _bn_fold(cout)
    w_taps = jnp.transpose(w, (2, 3, 1, 0)).reshape(9, cin, cout)
    return {"w": (w_taps * scale[None, None, :]).astype(jnp.bfloat16),
            "bias": bias.reshape(1, cout)}


def _make_bottleneck(key, inplanes, planes, stride, need_down):
    k1, k2, k3, k4 = jax.random.split(key, 4)
    return {
        "stride": stride,
        "conv1": _conv_mat_params(k1, inplanes, planes, 1, 1, 0),
        "conv2": _conv_tap_params(k2, planes, planes),
        "conv3": _conv_mat_params(k3, planes, planes * 4, 1, 1, 0),
        "down": (_conv_mat_params(k4, inplanes, planes * 4, 1, 1, 0)
                 if need_down else None),
    }


def make_resnet101_params(key, num_classes=1000):
    k_stem, k_layers, k_fc = jax.random.split(key, 3)
    params = {"stem": _conv_mat_params(k_stem, 3, 64, 7, 2, 3)}
    cfgs = [(64, 3, 1), (128, 4, 2), (256, 23, 2), (512, 3, 1)]  # layer4 stride=1 (spec)
    inplanes = 64
    layers = []
    for (planes, blocks, stride), lk in zip(cfgs, jax.random.split(k_layers, len(cfgs))):
        bkeys = jax.random.split(lk, blocks)
        blk = []
        for bi in range(blocks):
            st = stride if bi == 0 else 1
            need_down = (bi == 0) and (st != 1 or inplanes != planes * 4)
            blk.append(_make_bottleneck(bkeys[bi], inplanes, planes, st, need_down))
            inplanes = planes * 4
        layers.append(blk)
    params["layers"] = layers

    # fc: PyTorch default nn.Linear init (the init loop leaves Linear alone).
    fan_in = 512 * 4
    bound = 1.0 / math.sqrt(fan_in)
    kw, kb = jax.random.split(k_fc)
    ncp = ((num_classes + 127) // 128) * 128     # lane-dense fc output (pad cols)
    fc_w = jnp.zeros((fan_in, ncp), jnp.float32).at[:, :num_classes].set(
        jax.random.uniform(kw, (fan_in, num_classes), jnp.float32, -bound, bound))
    fc_b = jnp.zeros((1, ncp), jnp.float32).at[:, :num_classes].set(
        jax.random.uniform(kb, (1, num_classes), jnp.float32, -bound, bound))
    params["fc"] = {"w": fc_w.astype(jnp.bfloat16), "b": fc_b,
                    "num_classes": num_classes}
    return params


# ---------------------------------------------------------------------------
# Forward pass  (== ResNet.forward)
# ---------------------------------------------------------------------------
def bottleneck_fwd(x, p):
    # Stride lives on the 1x1 conv1 (and the 1x1 downsample): a strided 1x1
    # conv == spatial decimation followed by a dense 1x1 conv.
    x_in = x[:, ::p["stride"], ::p["stride"], :] if p["stride"] != 1 else x
    N, Ho, Wo, Cin = x_in.shape
    M = N * Ho * Wo
    x_flat = x_in.reshape(M, Cin)

    a1 = matmul_bias_act(x_flat, p["conv1"]["w"], p["conv1"]["bias"], None, relu=True)
    a2 = conv3x3_bn(a1.reshape(N, Ho, Wo, -1), p["conv2"], relu=True)

    if p["down"] is not None:
        res = matmul_bias_act(x_flat, p["down"]["w"], p["down"]["bias"], None,
                              relu=False)
    else:
        res = x_flat
    out = matmul_bias_act(a2.reshape(M, -1), p["conv3"]["w"], p["conv3"]["bias"],
                          res, relu=True)         # fused residual add + ReLU
    return out.reshape(N, Ho, Wo, -1)


def resnet_forward(im_data_nchw, params):
    """conv1 -> bn1 -> relu -> maxpool -> layer1..4 -> avgpool(7) -> flatten -> fc."""
    x = jnp.transpose(im_data_nchw, (0, 2, 3, 1)).astype(jnp.bfloat16)   # NHWC bf16
    x = stem_fwd(x, params["stem"])
    x = maxpool_3x3_s2_ceil(x)
    for layer in params["layers"]:
        for bp in layer:
            x = bottleneck_fwd(x, bp)
    return head_fwd(x, params["fc"])


if __name__ == "__main__":
    root = jax.random.PRNGKey(0)
    k_params, k_data = jax.random.split(root)
    params = make_resnet101_params(k_params, num_classes=1000)

    # 112x112 is the smallest input consistent with the spec's AvgPool2d(7) +
    # fc(2048) head given conv1/s2, ceil maxpool/s2, layer2/3 s2 and layer4 s1
    # (layer4 output is exactly 7x7).
    im_data = jax.random.normal(k_data, (2, 3, 112, 112), jnp.float32)

    logits = resnet_forward(im_data, params)
    logits = jax.block_until_ready(logits)

    assert logits.shape == (2, 1000), logits.shape
    assert bool(jnp.isfinite(logits).all()), "non-finite logits"
    print("KERNEL_OK")
</pallas_src>

<mosaic_0001>
module attributes {stable_mosaic.version = 11 : i64} {
  func.func @_mm_bias_kernel(%arg0: i32, %arg1: i32, %arg2: memref<448x147xbf16, #tpu.memory_space<vmem>>, %arg3: memref<147x64xbf16, #tpu.memory_space<vmem>>, %arg4: memref<1x64xf32, #tpu.memory_space<vmem>>, %arg5: memref<448x64xbf16, #tpu.memory_space<vmem>>) attributes {dimension_semantics = [#tpu.dimension_semantics<parallel>, #tpu.dimension_semantics<parallel>], iteration_bounds = array<i64: 14, 1>, scalar_prefetch = 0 : i64, scratch_operands = 0 : i64, tpu.core_type = #tpu.core_type<tc>, window_params = [{transform_indices = @transform_0, window_bounds = array<i64: 448, 147>}, {transform_indices = @transform_1, window_bounds = array<i64: 147, 64>}, {transform_indices = @transform_2, window_bounds = array<i64: 1, 64>}, {transform_indices = @transform_3, window_bounds = array<i64: 448, 64>}]} {
    %c0 = arith.constant 0 : index
    %c0_0 = arith.constant 0 : index
    %0 = vector.load %arg2[%c0, %c0_0] : memref<448x147xbf16, #tpu.memory_space<vmem>>, vector<448x147xbf16>
    %c0_1 = arith.constant 0 : index
    %c0_2 = arith.constant 0 : index
    %1 = vector.load %arg3[%c0_1, %c0_2] : memref<147x64xbf16, #tpu.memory_space<vmem>>, vector<147x64xbf16>
    %cst = arith.constant dense<0.000000e+00> : vector<448x64xf32>
    %2 = tpu.matmul %0, %1, %cst {dimension_numbers = #tpu.dot_dimension_numbers<[1], [0], [0], [1], [0, 0, 1, 1], [], []>} : vector<448x147xbf16>, vector<147x64xbf16>, vector<448x64xf32> -> vector<448x64xf32>
    %c0_3 = arith.constant 0 : index
    %c0_4 = arith.constant 0 : index
    %3 = vector.load %arg4[%c0_3, %c0_4] : memref<1x64xf32, #tpu.memory_space<vmem>>, vector<1x64xf32>
    %4 = vector.broadcast %3 : vector<1x64xf32> to vector<448x64xf32>
    %5 = arith.addf %2, %4 : vector<448x64xf32>
    %cst_5 = arith.constant 0.000000e+00 : f32
    %6 = vector.broadcast %cst_5 : f32 to vector<448x64xf32>
    %7 = arith.maximumf %5, %6 : vector<448x64xf32>
    %8 = arith.truncf %7 : vector<448x64xf32> to vector<448x64xbf16>
    %c0_6 = arith.constant 0 : index
    %c0_7 = arith.constant 0 : index
    %9 = vector.load %arg5[%c0_6, %c0_7] : memref<448x64xbf16, #tpu.memory_space<vmem>>, vector<448x64xbf16>
    tpu.vector_store %arg5[%c0_6, %c0_7], %8 {strides = array<i32>} : memref<448x64xbf16, #tpu.memory_space<vmem>>, vector<448x64xbf16>,
    return
  }
  func.func @transform_0(%arg0: i32, %arg1: i32) -> (i32, i32) {
    %c0_i32 = arith.constant 0 : i32
    %c0_i32_0 = arith.constant 0 : i32
    return %arg0, %c0_i32 : i32, i32
  }
  func.func @transform_1(%arg0: i32, %arg1: i32) -> (i32, i32) {
    %c0_i32 = arith.constant 0 : i32
    %c0_i32_0 = arith.constant 0 : i32
    return %c0_i32, %arg1 : i32, i32
  }
  func.func @transform_2(%arg0: i32, %arg1: i32) -> (i32, i32) {
    %c0_i32 = arith.constant 0 : i32
    %c0_i32_0 = arith.constant 0 : i32
    return %c0_i32, %arg1 : i32, i32
  }
  func.func @transform_3(%arg0: i32, %arg1: i32) -> (i32, i32) {
    %c0_i32 = arith.constant 0 : i32
    return %arg0, %arg1 : i32, i32
  }
}

</mosaic_0001>

<llo_original>
// kernel: tpu_custom_call.1
$region0: #{tpu_custom_call.1}
  #allocation0 [shape = 'u32[]', space=smem, size = 0x4, offset = 0x4, fixed_abs, tag = 'smem constant byte address 0x4 - core index']
  #allocation1 [shape = 'u32[144,128]{1,0:T(1,128)}', space=vmem, size = 0x12000, scoped, tag = 'internal scratch']
  %s0 = inlined_call_operand.vmem [shape: bf16[6272,147], index: 0, kind: input, shape index: {}]
  %s1 = inlined_call_operand.vmem [shape: bf16[147,64], index: 1, kind: input, shape index: {}]
  %s2 = inlined_call_operand.vmem [shape: f32[1,64], index: 2, kind: input, shape index: {}]
  %s3 = inlined_call_operand.vmem [shape: bf16[6272,64], index: 3, kind: output, shape index: {}]
  %s4 = sld [smem:[#allocation0]]
  $region45: #{tpu_custom_call.1} parent=0
    _
  %s6 = ssub.s32 1, %s4
  %s7 = scalar_select 0, %s6, %s4
  loop: start=0, step=1, limit=16
  $region2: #{tpu_custom_call.1} parent=0 // loop_pre_header
    _
  $region3: #{tpu_custom_call.1} parent=0 // loop_header
    %s9 = sphi 0, %s13
    %p10 = scmp.ge.s32.totalorder %s9, 16
    %s16 = sphi 0, %s28
    %s17 = sphi 0, %s24
    %s18 = sphi 0, %s16
    %s19 = sphi 0, %s17
    %s20 = sphi 0, %s18
    %s21 = sphi 0, %s19
    %s31 = sphi 0, %s33
    %s34 = sphi 0, %s31
    %s35 = sphi 0, %s34
    %s51 = sphi 0, %s35
    %s57 = sphi 0, %s59
    %s60 = sphi 0, %s57
    %s61 = sphi 0, %s60
    %s77 = sphi 0, %s61
    %s83 = sphi 0, %s85
    %s86 = sphi 0, %s83
    %s87 = sphi 0, %s86
    %s103 = sphi 0, %s87
    %s111 = sphi 0, %s113
    %s114 = sphi 0, %s111
    %s115 = sphi 0, %s114
    %s131 = sphi 0, %s115
  $region4: #{tpu_custom_call.1} parent=0 // loop_header_branch
    %12 = sbr.rel (%p10) target = $region8
  $region5: #{tpu_custom_call.1} parent=0 // loop_body
    %s14 = ssub.s32 %s9, 1
    %s15 = ssub.s32 %s9, 2
    %s22 = sadd.s32 1, %s17
    %p23 = scmp.ge.s32.totalorder %s22, 1
    %s24 = scalar_select %p23, 0, %s22
    %s25 = sadd.s32 1, %s16
    %s26 = scalar_select %p23, %s25, %s16
    %p27 = scmp.ge.s32.totalorder %s26, 14
    %s28 = scalar_select %p27, 0, %s26
    %s29 = ssub.s32 %s16, %s28
    %p30 = scmp.eq.s32.totalorder %s29, 0
    %s32 = sadd.s32 %s31, 1
    %s33 = scalar_select %p30, %s31, %s32
    %p36 = pneg %p30
    %p37 = scmp.eq.s32.totalorder %s9, 13
    %p38 = por %p36, %p37
    %p39 = scmp.ne.s32.totalorder %s31, %s34
    %p40 = scmp.eq.s32.totalorder %s9, 0
    %p41 = por %p39, %p40
    %p42 = scmp.ne.s32.totalorder %s31, %s34
    %p43 = scmp.eq.s32.totalorder %s14, 13
    %p44 = por %p42, %p43
    %p45 = scmp.ne.s32.totalorder %s34, %s35
    %p46 = scmp.eq.s32.totalorder %s14, 0
    %p47 = por %p45, %p46
    %p48 = scmp.ne.s32.totalorder %s34, %s35
    %p49 = scmp.eq.s32.totalorder %s15, 13
    %p50 = por %p48, %p49
    %p52 = scmp.ne.s32.totalorder %s35, %s51
    %p53 = scmp.eq.s32.totalorder %s15, 0
    %p54 = por %p52, %p53
    %s55 = ssub.s32 %s17, %s24
    %p56 = scmp.eq.s32.totalorder %s55, 0
    %s58 = sadd.s32 %s57, 1
    %s59 = scalar_select %p56, %s57, %s58
    %p62 = pneg %p56
    %p63 = scmp.eq.s32.totalorder %s9, 13
    %p64 = por %p62, %p63
    %p65 = scmp.ne.s32.totalorder %s57, %s60
    %p66 = scmp.eq.s32.totalorder %s9, 0
    %p67 = por %p65, %p66
    %p68 = scmp.ne.s32.totalorder %s57, %s60
    %p69 = scmp.eq.s32.totalorder %s14, 13
    %p70 = por %p68, %p69
    %p71 = scmp.ne.s32.totalorder %s60, %s61
    %p72 = scmp.eq.s32.totalorder %s14, 0
    %p73 = por %p71, %p72
    %p74 = scmp.ne.s32.totalorder %s60, %s61
    %p75 = scmp.eq.s32.totalorder %s15, 13
    %p76 = por %p74, %p75
    %p78 = scmp.ne.s32.totalorder %s61, %s77
    %p79 = scmp.eq.s32.totalorder %s15, 0
    %p80 = por %p78, %p79
    %s81 = ssub.s32 %s17, %s24
    %p82 = scmp.eq.s32.totalorder %s81, 0
    %s84 = sadd.s32 %s83, 1
    %s85 = scalar_select %p82, %s83, %s84
    %p88 = pneg %p82
    %p89 = scmp.eq.s32.totalorder %s9, 13
    %p90 = por %p88, %p89
    %p91 = scmp.ne.s32.totalorder %s83, %s86
    %p92 = scmp.eq.s32.totalorder %s9, 0
    %p93 = por %p91, %p92
    %p94 = scmp.ne.s32.totalorder %s83, %s86
    %p95 = scmp.eq.s32.totalorder %s14, 13
    %p96 = por %p94, %p95
    %p97 = scmp.ne.s32.totalorder %s86, %s87
    %p98 = scmp.eq.s32.totalorder %s14, 0
    %p99 = por %p97, %p98
    %p100 = scmp.ne.s32.totalorder %s86, %s87
    %p101 = scmp.eq.s32.totalorder %s15, 13
    %p102 = por %p100, %p101
    %p104 = scmp.ne.s32.totalorder %s87, %s103
    %p105 = scmp.eq.s32.totalorder %s15, 0
    %p106 = por %p104, %p105
    %s107 = ssub.s32 %s16, %s28
    %s108 = ssub.s32 %s17, %s24
    %s109 = sor.u32 %s107, %s108
    %p110 = scmp.eq.s32.totalorder %s109, 0
    %s112 = sadd.s32 %s111, 1
    %s113 = scalar_select %p110, %s111, %s112
    %p116 = pneg %p110
    %p117 = scmp.eq.s32.totalorder %s9, 13
    %p118 = por %p116, %p117
    %p119 = scmp.ne.s32.totalorder %s111, %s114
    %p120 = scmp.eq.s32.totalorder %s9, 0
    %p121 = por %p119, %p120
    %p122 = scmp.ne.s32.totalorder %s111, %s114
    %p123 = scmp.eq.s32.totalorder %s14, 13
    %p124 = por %p122, %p123
    %p125 = scmp.ne.s32.totalorder %s114, %s115
    %p126 = scmp.eq.s32.totalorder %s14, 0
    %p127 = por %p125, %p126
    %p128 = scmp.ne.s32.totalorder %s114, %s115
    %p129 = scmp.eq.s32.totalorder %s15, 13
    %p130 = por %p128, %p129
    %p132 = scmp.ne.s32.totalorder %s115, %s131
    %p133 = scmp.eq.s32.totalorder %s15, 0
    %p134 = por %p132, %p133
    %p135 = scmp.le.s32.totalorder 1, %s9
    %p136 = scmp.lt.s32.totalorder %s9, 15
    %p137 = pnand %p135, %p136
    %p138 = pneg %p137
    // Predicated region
    $region9: #{tpu_custom_call.1} parent=5 // pred_check
      _
    $region10: #{tpu_custom_call.1} parent=5 // pred_check_branch
      %140 = sbr.rel (%p137) target = $region12
    $region11: #{tpu_custom_call.1} parent=5 // pred_region
      %s141 = ssub.s32 %s9, 1
      // Predicated region
      $region13: #{tpu_custom_call.1} parent=11 // pred_check
        %p142 = pneg %p73
      $region14: #{tpu_custom_call.1} parent=11 // pred_check_branch
        %144 = sbr.rel (%p142) target = $region16
      $region15: #{tpu_custom_call.1} parent=11 // pred_region
        %p145 = scmp.lt.s32.totalorder %s19, 0
        %s146 = scalar_select %p145, %s19, 0
        %s147 = smul.addr %s146, 4
        %s148 = scalar_lea.vmem %s1, %s147
      $region16: #{tpu_custom_call.1} parent=11 // pred_fallthru
        _
      // Predicated region
      $region17: #{tpu_custom_call.1} parent=11 // pred_check
        %p149 = pneg %p99
      $region18: #{tpu_custom_call.1} parent=11 // pred_check_branch
        %151 = sbr.rel (%p149) target = $region20
      $region19: #{tpu_custom_call.1} parent=11 // pred_region
        %p152 = scmp.lt.s32.totalorder %s19, 0
        %s153 = scalar_select %p152, %s19, 0
        %s154 = scalar_lea.vmem %s2, %s153
      $region20: #{tpu_custom_call.1} parent=11 // pred_fallthru
        _
    $region12: #{tpu_custom_call.1} parent=5 // pred_fallthru
      _
    %p155 = scmp.lt.s32.totalorder %s9, 14
    // Predicated region
    $region21: #{tpu_custom_call.1} parent=5 // pred_check
      %p156 = pneg %p155
    $region22: #{tpu_custom_call.1} parent=5 // pred_check_branch
      %158 = sbr.rel (%p156) target = $region24
    $region23: #{tpu_custom_call.1} parent=5 // pred_region
      // Predicated region
      $region25: #{tpu_custom_call.1} parent=23 // pred_check
        %p159 = pneg %p41
      $region26: #{tpu_custom_call.1} parent=23 // pred_check_branch
        %161 = sbr.rel (%p159) target = $region28
      $region27: #{tpu_custom_call.1} parent=23 // pred_region
        %s162 = smul.u32 56, %s16
        %p163 = scmp.lt.s32.totalorder %s162, 783
        %s164 = scalar_select %p163, %s162, 783
        %s165 = smul.addr %s164, 2
        %s166 = smul.addr %s165, 4
        %s167 = scalar_lea.vmem %s0, %s166
        %s168 = smul.u32 56, %s16
      $region28: #{tpu_custom_call.1} parent=23 // pred_fallthru
        _
    $region24: #{tpu_custom_call.1} parent=5 // pred_fallthru
      _
    %p169 = scmp.le.s32.totalorder 1, %s9
    %p170 = scmp.lt.s32.totalorder %s9, 15
    %p171 = pnand %p169, %p170
    %p172 = pneg %p171
    // Predicated region
    $region29: #{tpu_custom_call.1} parent=5 // pred_check
      _
    $region30: #{tpu_custom_call.1} parent=5 // pred_check_branch
      %174 = sbr.rel (%p171) target = $region32
    $region31: #{tpu_custom_call.1} parent=5 // pred_region
      %s175 = ssub.s32 %s9, 1
      %s176 = smul.u32 56, %s18
      %p177 = scmp.lt.s32.totalorder %s176, 783
      %s178 = scalar_select %p177, %s176, 783
      %s179 = smul.addr %s178, 2
      %s180 = smul.addr %s179, 4
      %s181 = scalar_lea.vmem %s0, %s180
      %p182 = pneg %p47
      %p183 = pneg %p44
      %p184 = scmp.lt.s32.totalorder %s19, 0
      %s185 = scalar_select %p184, %s19, 0
      %s186 = smul.addr %s185, 4
      %s187 = scalar_lea.vmem %s1, %s186
      %p188 = pneg %p73
      %p189 = pneg %p70
      %p190 = scmp.lt.s32.totalorder %s19, 0
      %s191 = scalar_select %p190, %s19, 0
      %s192 = scalar_lea.vmem %s2, %s191
      %p193 = pneg %p99
      %p194 = pneg %p96
      %p195 = pneg %p127
      %p196 = pneg %p124
      %s197 = smul.u32 56, %s18
      %p198 = scmp.lt.s32.totalorder %s197, 783
      %s199 = scalar_select %p198, %s197, 783
      %p200 = scmp.lt.s32.totalorder %s19, 0
      %s201 = scalar_select %p200, %s19, 0
      %s202 = sadd.s32 %s201, %s199
      %s203 = smul.addr %s202, 4
      %s204 = scalar_lea.vmem %s3, %s203
      %s205 = smul.u32 56, %s18
      %p206 = scmp.lt.s32.totalorder %s205, 783
      %s207 = scalar_select %p206, %s205, 783
      %s208 = smul.addr %s207, 2
      %s209 = smul.addr %s208, 4
      %s210 = scalar_lea.vmem %s0, %s209
      %s211 = smul.u32 56, %s18
      %p212 = scmp.lt.s32.totalorder %s19, 0
      %s213 = scalar_select %p212, %s19, 0
      %s214 = smul.addr %s213, 4
      %s215 = scalar_lea.vmem %s1, %s214
      %p216 = scmp.lt.s32.totalorder %s19, 0
      %s217 = scalar_select %p216, %s19, 0
      %s218 = scalar_lea.vmem %s2, %s217
      %s219 = smul.u32 56, %s18
      %p220 = scmp.lt.s32.totalorder %s219, 783
      %s221 = scalar_select %p220, %s219, 783
      %p222 = scmp.lt.s32.totalorder %s19, 0
      %s223 = scalar_select %p222, %s19, 0
      %s224 = sadd.s32 %s223, %s221
      %s225 = smul.addr %s224, 4
      %s226 = scalar_lea.vmem %s3, %s225
      %s227 = smul.u32 56, %s18
      %v229 = vld [vmem:[%s210] sm:$0xff]
      %v230 = vld [vmem:[%s210 + $0x8] sm:$0xff]
      %v231 = vld [vmem:[%s210 + $0x10] sm:$0xff]
      %v232 = vld [vmem:[%s210 + $0x18] sm:$0xff]
      %v233 = vld [vmem:[%s210 + $0x20] sm:$0xff]
      %v234 = vld [vmem:[%s210 + $0x28] sm:$0xff]
      %v235 = vld [vmem:[%s210 + $0x30] sm:$0xff]
      %v236 = vld [vmem:[%s210 + $0x38] sm:$0xff]
      %v237 = vld [vmem:[%s210 + $0x40] sm:$0xff]
      %v238 = vld [vmem:[%s210 + $0x48] sm:$0xff]
      %v239 = vld [vmem:[%s210 + $0x50] sm:$0xff]
      %v240 = vld [vmem:[%s210 + $0x58] sm:$0xff]
      %v241 = vld [vmem:[%s210 + $0x60] sm:$0xff]
      %v242 = vld [vmem:[%s210 + $0x68] sm:$0xff]
      %v243 = vld [vmem:[%s210 + $0x70] sm:$0xff]
      %v244 = vld [vmem:[%s210 + $0x78] sm:$0xff]
      %v245 = vld [vmem:[%s210 + $0x80] sm:$0xff]
      %v246 = vld [vmem:[%s210 + $0x88] sm:$0xff]
      %v247 = vld [vmem:[%s210 + $0x90] sm:$0xff]
      %v248 = vld [vmem:[%s210 + $0x98] sm:$0xff]
      %v249 = vld [vmem:[%s210 + $0xa0] sm:$0xff]
      %v250 = vld [vmem:[%s210 + $0xa8] sm:$0xff]
      %v251 = vld [vmem:[%s210 + $0xb0] sm:$0xff]
      %v252 = vld [vmem:[%s210 + $0xb8] sm:$0xff]
      %v253 = vld [vmem:[%s210 + $0xc0] sm:$0xff]
      %v254 = vld [vmem:[%s210 + $0xc8] sm:$0xff]
      %v255 = vld [vmem:[%s210 + $0xd0] sm:$0xff]
      %v256 = vld [vmem:[%s210 + $0xd8] sm:$0xff]
      %v257 = vld [vmem:[%s210 + $0xe0] sm:$0xff]
      %v258 = vld [vmem:[%s210 + $0xe8] sm:$0xff]
      %v259 = vld [vmem:[%s210 + $0xf0] sm:$0xff]
      %v260 = vld [vmem:[%s210 + $0xf8] sm:$0xff]
      %v261 = vld [vmem:[%s210 + $0x100] sm:$0xff]
      %v262 = vld [vmem:[%s210 + $0x108] sm:$0xff]
      %v263 = vld [vmem:[%s210 + $0x110] sm:$0xff]
      %v264 = vld [vmem:[%s210 + $0x118] sm:$0xff]
      %v265 = vld [vmem:[%s210 + $0x120] sm:$0xff]
      %v266 = vld [vmem:[%s210 + $0x128] sm:$0xff]
      %v267 = vld [vmem:[%s210 + $0x130] sm:$0xff]
      %v268 = vld [vmem:[%s210 + $0x138] sm:$0xff]
      %v269 = vld [vmem:[%s210 + $0x140] sm:$0xff]
      %v270 = vld [vmem:[%s210 + $0x148] sm:$0xff]
      %v271 = vld [vmem:[%s210 + $0x150] sm:$0xff]
      %v272 = vld [vmem:[%s210 + $0x158] sm:$0xff]
      %v273 = vld [vmem:[%s210 + $0x160] sm:$0xff]
      %v274 = vld [vmem:[%s210 + $0x168] sm:$0xff]
      %v275 = vld [vmem:[%s210 + $0x170] sm:$0xff]
      %v276 = vld [vmem:[%s210 + $0x178] sm:$0xff]
      %v277 = vld [vmem:[%s210 + $0x180] sm:$0xff]
      %v278 = vld [vmem:[%s210 + $0x188] sm:$0xff]
      %v279 = vld [vmem:[%s210 + $0x190] sm:$0xff]
      %v280 = vld [vmem:[%s210 + $0x198] sm:$0xff]
      %v281 = vld [vmem:[%s210 + $0x1a0] sm:$0xff]
      %v282 = vld [vmem:[%s210 + $0x1a8] sm:$0xff]
      %v283 = vld [vmem:[%s210 + $0x1b0] sm:$0xff]
      %v284 = vld [vmem:[%s210 + $0x1b8] sm:$0xff]
      %v285 = vld [vmem:[%s215] sm:$0xf]
      %v286 = vld [vmem:[%s215 + $0x4] sm:$0xf]
      %v287 = vld [vmem:[%s215 + $0x8] sm:$0xf]
      %v288 = vld [vmem:[%s215 + $0xc] sm:$0xf]
      %v289 = vld [vmem:[%s215 + $0x10] sm:$0xf]
      %v290 = vld [vmem:[%s215 + $0x14] sm:$0xf]
      %v291 = vld [vmem:[%s215 + $0x18] sm:$0xf]
      %v292 = vld [vmem:[%s215 + $0x1c] sm:$0xf]
      %v293 = vld [vmem:[%s215 + $0x20] sm:$0xf]
      %v294 = vld [vmem:[%s215 + $0x24] sm:$0xf]
      %v295 = vld [vmem:[%s215 + $0x28] sm:$0xf]
      %v296 = vld [vmem:[%s215 + $0x2c] sm:$0xf]
      %v297 = vld [vmem:[%s215 + $0x30] sm:$0xf]
      %v298 = vld [vmem:[%s215 + $0x34] sm:$0xf]
      %v299 = vld [vmem:[%s215 + $0x38] sm:$0xf]
      %v300 = vld [vmem:[%s215 + $0x3c] sm:$0xf]
      %v301 = vld [vmem:[%s215 + $0x40] sm:$0xf]
      %v302 = vld [vmem:[%s215 + $0x44] sm:$0xf]
      %v303 = vld [vmem:[%s215 + $0x48] sm:$0x3]
      %v304 = vld [vmem:[%s218] sm:$0x1]
      %v306 = vlaneseq
      %v307 = vshrl.u32 %v306, 7
      %v308 = vsub.s32 0, %v307
      %v309 = vrot.slane %v304, %v308
      %v367 = vunpack.c.l.b16 %v229
      %v368 = vunpack.c.h.b16 %v229
      %v369 = vunpack.c.l.b16 %v230
      %v370 = vunpack.c.h.b16 %v230
      %v371 = vunpack.c.l.b16 %v231
      %v372 = vunpack.c.h.b16 %v231
      %v373 = vunpack.c.l.b16 %v232
      %v374 = vunpack.c.h.b16 %v232
      %v375 = vunpack.c.l.b16 %v233
      %v376 = vunpack.c.h.b16 %v233
      %v377 = vunpack.c.l.b16 %v234
      %v378 = vunpack.c.h.b16 %v234
      %v379 = vunpack.c.l.b16 %v235
      %v380 = vunpack.c.h.b16 %v235
      %v381 = vunpack.c.l.b16 %v236
      %v382 = vunpack.c.h.b16 %v236
      %v383 = vunpack.c.l.b16 %v237
      %v384 = vunpack.c.h.b16 %v237
      %v385 = vunpack.c.l.b16 %v238
      %v386 = vunpack.c.h.b16 %v238
      %v387 = vunpack.c.l.b16 %v239
      %v388 = vunpack.c.h.b16 %v239
      %v389 = vunpack.c.l.b16 %v240
      %v390 = vunpack.c.h.b16 %v240
      %v391 = vunpack.c.l.b16 %v241
      %v392 = vunpack.c.h.b16 %v241
      %v393 = vunpack.c.l.b16 %v242
      %v394 = vunpack.c.h.b16 %v242
      %v395 = vunpack.c.l.b16 %v243
      %v396 = vunpack.c.h.b16 %v243
      %v397 = vunpack.c.l.b16 %v244
      %v398 = vunpack.c.h.b16 %v244
      %v399 = vunpack.c.l.b16 %v245
      %v400 = vunpack.c.h.b16 %v245
      %v401 = vunpack.c.l.b16 %v246
      %v402 = vunpack.c.h.b16 %v246
      %v403 = vunpack.c.l.b16 %v247
      %v404 = vunpack.c.h.b16 %v247
      %v405 = vunpack.c.l.b16 %v248
      %v406 = vunpack.c.h.b16 %v248
      %v407 = vunpack.c.l.b16 %v249
      %v408 = vunpack.c.h.b16 %v249
      %v409 = vunpack.c.l.b16 %v250
      %v410 = vunpack.c.h.b16 %v250
      %v411 = vunpack.c.l.b16 %v251
      %v412 = vunpack.c.h.b16 %v251
      %v413 = vunpack.c.l.b16 %v252
      %v414 = vunpack.c.h.b16 %v252
      %v415 = vunpack.c.l.b16 %v253
      %v416 = vunpack.c.h.b16 %v253
      %v417 = vunpack.c.l.b16 %v254
      %v418 = vunpack.c.h.b16 %v254
      %v419 = vunpack.c.l.b16 %v255
      %v420 = vunpack.c.h.b16 %v255
      %v421 = vunpack.c.l.b16 %v256
      %v422 = vunpack.c.h.b16 %v256
      %v423 = vunpack.c.l.b16 %v257
      %v424 = vunpack.c.h.b16 %v257
      %v425 = vunpack.c.l.b16 %v258
      %v426 = vunpack.c.h.b16 %v258
      %v427 = vunpack.c.l.b16 %v259
      %v428 = vunpack.c.h.b16 %v259
      %v429 = vunpack.c.l.b16 %v260
      %v430 = vunpack.c.h.b16 %v260
      %v431 = vunpack.c.l.b16 %v261
      %v432 = vunpack.c.h.b16 %v261
      %v433 = vunpack.c.l.b16 %v262
      %v434 = vunpack.c.h.b16 %v262
      %v435 = vunpack.c.l.b16 %v263
      %v436 = vunpack.c.h.b16 %v263
      %v437 = vunpack.c.l.b16 %v264
      %v438 = vunpack.c.h.b16 %v264
      %v439 = vunpack.c.l.b16 %v265
      %v440 = vunpack.c.h.b16 %v265
      %v441 = vunpack.c.l.b16 %v266
      %v442 = vunpack.c.h.b16 %v266
      %v443 = vunpack.c.l.b16 %v267
      %v444 = vunpack.c.h.b16 %v267
      %v445 = vunpack.c.l.b16 %v268
      %v446 = vunpack.c.h.b16 %v268
      %v447 = vunpack.c.l.b16 %v269
      %v448 = vunpack.c.h.b16 %v269
      %v449 = vunpack.c.l.b16 %v270
      %v450 = vunpack.c.h.b16 %v270
      %v451 = vunpack.c.l.b16 %v271
      %v452 = vunpack.c.h.b16 %v271
      %v453 = vunpack.c.l.b16 %v272
      %v454 = vunpack.c.h.b16 %v272
      %v455 = vunpack.c.l.b16 %v273
      %v456 = vunpack.c.h.b16 %v273
      %v457 = vunpack.c.l.b16 %v274
      %v458 = vunpack.c.h.b16 %v274
      %v459 = vunpack.c.l.b16 %v275
      %v460 = vunpack.c.h.b16 %v275
      %v461 = vunpack.c.l.b16 %v276
      %v462 = vunpack.c.h.b16 %v276
      %v463 = vunpack.c.l.b16 %v277
      %v464 = vunpack.c.h.b16 %v277
      %v465 = vunpack.c.l.b16 %v278
      %v466 = vunpack.c.h.b16 %v278
      %v467 = vunpack.c.l.b16 %v279
      %v468 = vunpack.c.h.b16 %v279
      %v469 = vunpack.c.l.b16 %v280
      %v470 = vunpack.c.h.b16 %v280
      %v471 = vunpack.c.l.b16 %v281
      %v472 = vunpack.c.h.b16 %v281
      %v473 = vunpack.c.l.b16 %v282
      %v474 = vunpack.c.h.b16 %v282
      %v475 = vunpack.c.l.b16 %v283
      %v476 = vunpack.c.h.b16 %v283
      %v477 = vunpack.c.l.b16 %v284
      %v478 = vunpack.c.h.b16 %v284
      %v479 = vpack.c.b16 %v369, %v367
      %v480 = vpack.c.b16 %v370, %v368
      %v481 = vpack.c.b16 %v373, %v371
      %v482 = vpack.c.b16 %v374, %v372
      %v483 = vpack.c.b16 %v377, %v375
      %v484 = vpack.c.b16 %v378, %v376
      %v485 = vpack.c.b16 %v381, %v379
      %v486 = vpack.c.b16 %v382, %v380
      %v487 = vpack.c.b16 %v385, %v383
      %v488 = vpack.c.b16 %v386, %v384
      %v489 = vpack.c.b16 %v389, %v387
      %v490 = vpack.c.b16 %v390, %v388
      %v491 = vpack.c.b16 %v393, %v391
      %v492 = vpack.c.b16 %v394, %v392
      %v493 = vpack.c.b16 %v397, %v395
      %v494 = vpack.c.b16 %v398, %v396
      %v495 = vpack.c.b16 %v401, %v399
      %v496 = vpack.c.b16 %v402, %v400
      %v497 = vpack.c.b16 %v405, %v403
      %v498 = vpack.c.b16 %v406, %v404
      %v499 = vpack.c.b16 %v409, %v407
      %v500 = vpack.c.b16 %v410, %v408
      %v501 = vpack.c.b16 %v413, %v411
      %v502 = vpack.c.b16 %v414, %v412
      %v503 = vpack.c.b16 %v417, %v415
      %v504 = vpack.c.b16 %v418, %v416
      %v505 = vpack.c.b16 %v421, %v419
      %v506 = vpack.c.b16 %v422, %v420
      %v507 = vpack.c.b16 %v425, %v423
      %v508 = vpack.c.b16 %v426, %v424
      %v509 = vpack.c.b16 %v429, %v427
      %v510 = vpack.c.b16 %v430, %v428
      %v511 = vpack.c.b16 %v433, %v431
      %v512 = vpack.c.b16 %v434, %v432
      %v513 = vpack.c.b16 %v437, %v435
      %v514 = vpack.c.b16 %v438, %v436
      %v515 = vpack.c.b16 %v441, %v439
      %v516 = vpack.c.b16 %v442, %v440
      %v517 = vpack.c.b16 %v445, %v443
      %v518 = vpack.c.b16 %v446, %v444
      %v519 = vpack.c.b16 %v449, %v447
      %v520 = vpack.c.b16 %v450, %v448
      %v521 = vpack.c.b16 %v453, %v451
      %v522 = vpack.c.b16 %v454, %v452
      %v523 = vpack.c.b16 %v457, %v455
      %v524 = vpack.c.b16 %v458, %v456
      %v525 = vpack.c.b16 %v461, %v459
      %v526 = vpack.c.b16 %v462, %v460
      %v527 = vpack.c.b16 %v465, %v463
      %v528 = vpack.c.b16 %v466, %v464
      %v529 = vpack.c.b16 %v469, %v467
      %v530 = vpack.c.b16 %v470, %v468
      %v531 = vpack.c.b16 %v473, %v471
      %v532 = vpack.c.b16 %v474, %v472
      %v533 = vpack.c.b16 %v477, %v475
      %v534 = vpack.c.b16 %v478, %v476
      %v582 = vunpack.c.l.b16 %v285
      %v583 = vunpack.c.l.b16 %v286
      %v584 = vunpack.c.l.b16 %v287
      %v585 = vunpack.c.l.b16 %v288
      %v586 = vunpack.c.l.b16 %v289
      %v587 = vunpack.c.l.b16 %v290
      %v588 = vunpack.c.l.b16 %v291
      %v589 = vunpack.c.l.b16 %v292
      %v590 = vunpack.c.l.b16 %v293
      %v591 = vunpack.c.l.b16 %v294
      %v592 = vunpack.c.l.b16 %v295
      %v593 = vunpack.c.l.b16 %v296
      %v594 = vunpack.c.l.b16 %v297
      %v595 = vunpack.c.l.b16 %v298
      %v596 = vunpack.c.l.b16 %v299
      %v597 = vunpack.c.l.b16 %v300
      %v598 = vunpack.c.l.b16 %v301
      %v599 = vunpack.c.l.b16 %v302
      %v600 = vunpack.c.l.b16 %v303
      %v601 = vpack.c.b16 %v583, %v582
      %v602 = vpack.c.b16 %v585, %v584
      %v603 = vpack.c.b16 %v587, %v586
      %v604 = vpack.c.b16 %v589, %v588
      %v605 = vpack.c.b16 %v591, %v590
      %v606 = vpack.c.b16 %v593, %v592
      %v607 = vpack.c.b16 %v595, %v594
      %v608 = vpack.c.b16 %v597, %v596
      %v609 = vpack.c.b16 %v599, %v598
      %v610 = vpack.c.b16 %v600, %v600
      %vm620 = vcmask 154624
      %v622 = vsel %vm620, %v480, 0
      %v625 = vsel %vm620, %v482, 0
      %v628 = vsel %vm620, %v484, 0
      %v631 = vsel %vm620, %v486, 0
      %v634 = vsel %vm620, %v488, 0
      %v637 = vsel %vm620, %v490, 0
      %v640 = vsel %vm620, %v492, 0
      %v643 = vsel %vm620, %v494, 0
      %v646 = vsel %vm620, %v496, 0
      %v649 = vsel %vm620, %v498, 0
      %v652 = vsel %vm620, %v500, 0
      %v655 = vsel %vm620, %v502, 0
      %v658 = vsel %vm620, %v504, 0
      %v661 = vsel %vm620, %v506, 0
      %v664 = vsel %vm620, %v508, 0
      %v667 = vsel %vm620, %v510, 0
      %v670 = vsel %vm620, %v512, 0
      %v673 = vsel %vm620, %v514, 0
      %v676 = vsel %vm620, %v516, 0
      %v679 = vsel %vm620, %v518, 0
      %v682 = vsel %vm620, %v520, 0
      %v685 = vsel %vm620, %v522, 0
      %v688 = vsel %vm620, %v524, 0
      %v691 = vsel %vm620, %v526, 0
      %v694 = vsel %vm620, %v528, 0
      %v697 = vsel %vm620, %v530, 0
      %v700 = vsel %vm620, %v532, 0
      %v703 = vsel %vm620, %v534, 0
      %vm705 = vcmask 1040384
      %vm706 = vcmask 1041408
      %v707 = vsel %vm705, 4294967295, 65535
      %v708 = vsel %vm706, %v707, 0
      %v710 = vand.u32 %v610, %v708
      %712 = vmatprep.subr.bf16.mxu0 0
      %713 = vmatpush1.bf16.msra.mxu0 %v601
      %714 = vmatprep.subr.bf16.mxu0 0
      %715 = vmatpush1.bf16.msra.mxu0 %v602
      %716 = vmatprep.subr.bf16.mxu0 0
      %717 = vmatpush1.bf16.msra.mxu0 %v603
      %718 = vmatprep.subr.bf16.mxu0 0
      %719 = vmatpush1.bf16.msra.mxu0 %v604
      %720 = vmatprep.subr.bf16.mxu0 0
      %721 = vmatpush1.bf16.msra.mxu0 %v605
      %722 = vmatprep.subr.bf16.mxu0 0
      %723 = vmatpush1.bf16.msra.mxu0 %v606
      %724 = vmatprep.subr.bf16.mxu0 0
      %725 = vmatpush1.bf16.msra.mxu0 %v607
      %726 = vmatprep.subr.bf16.mxu0 0
      %727 = vmatpush1.bf16.msra.mxu0 %v608
      %728 = vmatprep.subr.bf16.mxu0 0
      %729 = vmatpush1.bf16.msra.mxu0 %v609
      %730 = vmatprep.subr.bf16.mxu0 0
      %731 = vmatpush1.bf16.msra.mxu0 %v710
      %732 = vmatprep.subr.bf16.mxu0 0
      %733 = vmatpush1.bf16.msra.mxu0 0
      %734 = vmatprep.subr.bf16.mxu0 0
      %735 = vmatpush1.bf16.msra.mxu0 0
      %736 = vmatprep.subr.bf16.mxu0 0
      %737 = vmatpush1.bf16.msra.mxu0 0
      %738 = vmatprep.subr.bf16.mxu0 0
      %739 = vmatpush1.bf16.msra.mxu0 0
      %740 = vmatprep.subr.bf16.mxu0 0
      %741 = vmatpush1.bf16.msra.mxu0 0
      %742 = vmatprep.subr.bf16.mxu0 0
      %743 = vmatpush1.bf16.msra.mxu0 0
      %744 = vmatprep.mubr.bf16.mxu0 %v622
      %745 = vmatmul.mubr.bf16.gmra.mrb[0].mxu0 %v479
      %v746 = vpop.f32.mrb[0].mxu0
      %v747 = vadd.f32 %v309, %v746
      %v748 = vpop.f32.mrb[0].mxu0
      %v749 = vpop.f32.mrb[0].mxu0
      %v750 = vadd.f32 %v309, %v749
      %v751 = vpop.f32.mrb[0].mxu0
      %752 = vmatprep.mubr.bf16.mxu0 %v625
      %753 = vmatmul.mubr.bf16.gmra.mrb[0].mxu0 %v481
      %v754 = vpop.f32.mrb[0].mxu0
      %v755 = vadd.f32 %v309, %v754
      %v756 = vpop.f32.mrb[0].mxu0
      %v757 = vpop.f32.mrb[0].mxu0
      %v758 = vadd.f32 %v309, %v757
      %v759 = vpop.f32.mrb[0].mxu0
      %760 = vmatprep.mubr.bf16.mxu0 %v628
      %761 = vmatmul.mubr.bf16.gmra.mrb[0].mxu0 %v483
      %v762 = vpop.f32.mrb[0].mxu0
      %v763 = vadd.f32 %v309, %v762
      %v764 = vpop.f32.mrb[0].mxu0
      %v765 = vpop.f32.mrb[0].mxu0
      %v766 = vadd.f32 %v309, %v765
      %v767 = vpop.f32.mrb[0].mxu0
      %768 = vmatprep.mubr.bf16.mxu0 %v631
      %769 = vmatmul.mubr.bf16.gmra.mrb[0].mxu0 %v485
      %v770 = vpop.f32.mrb[0].mxu0
      %v771 = vadd.f32 %v309, %v770
      %v772 = vpop.f32.mrb[0].mxu0
      %v773 = vpop.f32.mrb[0].mxu0
      %v774 = vadd.f32 %v309, %v773
      %v775 = vpop.f32.mrb[0].mxu0
      %776 = vmatprep.mubr.bf16.mxu0 %v634
      %777 = vmatmul.mubr.bf16.gmra.mrb[0].mxu0 %v487
      %v778 = vpop.f32.mrb[0].mxu0
      %v779 = vadd.f32 %v309, %v778
      %v780 = vpop.f32.mrb[0].mxu0
      %v781 = vpop.f32.mrb[0].mxu0
      %v782 = vadd.f32 %v309, %v781
      %v783 = vpop.f32.mrb[0].mxu0
      %784 = vmatprep.mubr.bf16.mxu0 %v637
      %785 = vmatmul.mubr.bf16.gmra.mrb[0].mxu0 %v489
      %v786 = vpop.f32.mrb[0].mxu0
      %v787 = vadd.f32 %v309, %v786
      %v788 = vpop.f32.mrb[0].mxu0
      %v789 = vpop.f32.mrb[0].mxu0
      %v790 = vadd.f32 %v309, %v789
      %v791 = vpop.f32.mrb[0].mxu0
      %792 = vmatprep.mubr.bf16.mxu0 %v640
      %793 = vmatmul.mubr.bf16.gmra.mrb[0].mxu0 %v491
      %v794 = vpop.f32.mrb[0].mxu0
      %v795 = vadd.f32 %v309, %v794
      %v796 = vpop.f32.mrb[0].mxu0
      %v797 = vpop.f32.mrb[0].mxu0
      %v798 = vadd.f32 %v309, %v797
      %v799 = vpop.f32.mrb[0].mxu0
      %800 = vmatprep.mubr.bf16.mxu0 %v643
      %801 = vmatmul.mubr.bf16.gmra.mrb[0].mxu0 %v493
      %v802 = vpop.f32.mrb[0].mxu0
      %v803 = vadd.f32 %v309, %v802
      %v804 = vpop.f32.mrb[0].mxu0
      %v805 = vpop.f32.mrb[0].mxu0
      %v806 = vadd.f32 %v309, %v805
      %v807 = vpop.f32.mrb[0].mxu0
      %808 = vmatprep.mubr.bf16.mxu0 %v646
      %809 = vmatmul.mubr.bf16.gmra.mrb[0].mxu0 %v495
      %v810 = vpop.f32.mrb[0].mxu0
      %v811 = vadd.f32 %v309, %v810
      %v812 = vpop.f32.mrb[0].mxu0
      %v813 = vpop.f32.mrb[0].mxu0
      %v814 = vadd.f32 %v309, %v813
      %v815 = vpop.f32.mrb[0].mxu0
      %816 = vmatprep.mubr.bf16.mxu0 %v649
      %817 = vmatmul.mubr.bf16.gmra.mrb[0].mxu0 %v497
      %v818 = vpop.f32.mrb[0].mxu0
      %v819 = vadd.f32 %v309, %v818
      %v820 = vpop.f32.mrb[0].mxu0
      %v821 = vpop.f32.mrb[0].mxu0
      %v822 = vadd.f32 %v309, %v821
      %v823 = vpop.f32.mrb[0].mxu0
      %824 = vmatprep.mubr.bf16.mxu0 %v652
      %825 = vmatmul.mubr.bf16.gmra.mrb[0].mxu0 %v499
      %v826 = vpop.f32.mrb[0].mxu0
      %v827 = vadd.f32 %v309, %v826
      %v828 = vpop.f32.mrb[0].mxu0
      %v829 = vpop.f32.mrb[0].mxu0
      %v830 = vadd.f32 %v309, %v829
      %v831 = vpop.f32.mrb[0].mxu0
      %832 = vmatprep.mubr.bf16.mxu0 %v655
      %833 = vmatmul.mubr.bf16.gmra.mrb[0].mxu0 %v501
      %v834 = vpop.f32.mrb[0].mxu0
      %v835 = vadd.f32 %v309, %v834
      %v836 = vpop.f32.mrb[0].mxu0
      %v837 = vpop.f32.mrb[0].mxu0
      %v838 = vadd.f32 %v309, %v837
      %v839 = vpop.f32.mrb[0].mxu0
      %840 = vmatprep.mubr.bf16.mxu0 %v658
      %841 = vmatmul.mubr.bf16.gmra.mrb[0].mxu0 %v503
      %v842 = vpop.f32.mrb[0].mxu0
      %v843 = vadd.f32 %v309, %v842
      %v844 = vpop.f32.mrb[0].mxu0
      %v845 = vpop.f32.mrb[0].mxu0
      %v846 = vadd.f32 %v309, %v845
      %v847 = vpop.f32.mrb[0].mxu0
      %848 = vmatprep.mubr.bf16.mxu0 %v661
      %849 = vmatmul.mubr.bf16.gmra.mrb[0].mxu0 %v505
      %v850 = vpop.f32.mrb[0].mxu0
      %v851 = vadd.f32 %v309, %v850
      %v852 = vpop.f32.mrb[0].mxu0
      %v853 = vpop.f32.mrb[0].mxu0
      %v854 = vadd.f32 %v309, %v853
      %v855 = vpop.f32.mrb[0].mxu0
      %856 = vmatprep.mubr.bf16.mxu0 %v664
      %857 = vmatmul.mubr.bf16.gmra.mrb[0].mxu0 %v507
      %v858 = vpop.f32.mrb[0].mxu0
      %v859 = vadd.f32 %v309, %v858
      %v860 = vpop.f32.mrb[0].mxu0
      %v861 = vpop.f32.mrb[0].mxu0
      %v862 = vadd.f32 %v309, %v861
      %v863 = vpop.f32.mrb[0].mxu0
      %864 = vmatprep.mubr.bf16.mxu0 %v667
      %865 = vmatmul.mubr.bf16.gmra.mrb[0].mxu0 %v509
      %v866 = vpop.f32.mrb[0].mxu0
      %v867 = vadd.f32 %v309, %v866
      %v868 = vpop.f32.mrb[0].mxu0
      %v869 = vpop.f32.mrb[0].mxu0
      %v870 = vadd.f32 %v309, %v869
      %v871 = vpop.f32.mrb[0].mxu0
      %872 = vmatprep.mubr.bf16.mxu0 %v670
      %873 = vmatmul.mubr.bf16.gmra.mrb[0].mxu0 %v511
      %v874 = vpop.f32.mrb[0].mxu0
      %v875 = vadd.f32 %v309, %v874
      %v876 = vpop.f32.mrb[0].mxu0
      %v877 = vpop.f32.mrb[0].mxu0
      %v878 = vadd.f32 %v309, %v877
      %v879 = vpop.f32.mrb[0].mxu0
      %880 = vmatprep.mubr.bf16.mxu0 %v673
      %881 = vmatmul.mubr.bf16.gmra.mrb[0].mxu0 %v513
      %v882 = vpop.f32.mrb[0].mxu0
      %v883 = vadd.f32 %v309, %v882
      %v884 = vpop.f32.mrb[0].mxu0
      %v885 = vpop.f32.mrb[0].mxu0
      %v886 = vadd.f32 %v309, %v885
      %v887 = vpop.f32.mrb[0].mxu0
      %888 = vmatprep.mubr.bf16.mxu0 %v676
      %889 = vmatmul.mubr.bf16.gmra.mrb[0].mxu0 %v515
      %v890 = vpop.f32.mrb[0].mxu0
      %v891 = vadd.f32 %v309, %v890
      %v892 = vpop.f32.mrb[0].mxu0
      %v893 = vpop.f32.mrb[0].mxu0
      %v894 = vadd.f32 %v309, %v893
      %v895 = vpop.f32.mrb[0].mxu0
      %896 = vmatprep.mubr.bf16.mxu0 %v679
      %897 = vmatmul.mubr.bf16.gmra.mrb[0].mxu0 %v517
      %v898 = vpop.f32.mrb[0].mxu0
      %v899 = vadd.f32 %v309, %v898
      %v900 = vpop.f32.mrb[0].mxu0
      %v901 = vpop.f32.mrb[0].mxu0
      %v902 = vadd.f32 %v309, %v901
      %v903 = vpop.f32.mrb[0].mxu0
      %904 = vmatprep.mubr.bf16.mxu0 %v682
      %905 = vmatmul.mubr.bf16.gmra.mrb[0].mxu0 %v519
      %v906 = vpop.f32.mrb[0].mxu0
      %v907 = vadd.f32 %v309, %v906
      %v908 = vpop.f32.mrb[0].mxu0
      %v909 = vpop.f32.mrb[0].mxu0
      %v910 = vadd.f32 %v309, %v909
      %v911 = vpop.f32.mrb[0].mxu0
      %912 = vmatprep.mubr.bf16.mxu0 %v685
      %913 = vmatmul.mubr.bf16.gmra.mrb[0].mxu0 %v521
      %v914 = vpop.f32.mrb[0].mxu0
      %v915 = vadd.f32 %v309, %v914
      %v916 = vpop.f32.mrb[0].mxu0
      %v917 = vpop.f32.mrb[0].mxu0
      %v918 = vadd.f32 %v309, %v917
      %v919 = vpop.f32.mrb[0].mxu0
      %920 = vmatprep.mubr.bf16.mxu0 %v688
      %921 = vmatmul.mubr.bf16.gmra.mrb[0].mxu0 %v523
      %v922 = vpop.f32.mrb[0].mxu0
      %v923 = vadd.f32 %v309, %v922
      %v924 = vpop.f32.mrb[0].mxu0
      %v925 = vpop.f32.mrb[0].mxu0
      %v926 = vadd.f32 %v309, %v925
      %v927 = vpop.f32.mrb[0].mxu0
      %928 = vmatprep.mubr.bf16.mxu0 %v691
      %929 = vmatmul.mubr.bf16.gmra.mrb[0].mxu0 %v525
      %v930 = vpop.f32.mrb[0].mxu0
      %v931 = vadd.f32 %v309, %v930
      %v932 = vpop.f32.mrb[0].mxu0
      %v933 = vpop.f32.mrb[0].mxu0
      %v934 = vadd.f32 %v309, %v933
      %v935 = vpop.f32.mrb[0].mxu0
      %936 = vmatprep.mubr.bf16.mxu0 %v694
      %937 = vmatmul.mubr.bf16.gmra.mrb[0].mxu0 %v527
      %v938 = vpop.f32.mrb[0].mxu0
      %v939 = vadd.f32 %v309, %v938
      %v940 = vpop.f32.mrb[0].mxu0
      %v941 = vpop.f32.mrb[0].mxu0
      %v942 = vadd.f32 %v309, %v941
      %v943 = vpop.f32.mrb[0].mxu0
      %944 = vmatprep.mubr.bf16.mxu0 %v697
      %945 = vmatmul.mubr.bf16.gmra.mrb[0].mxu0 %v529
      %v946 = vpop.f32.mrb[0].mxu0
      %v947 = vadd.f32 %v309, %v946
      %v948 = vpop.f32.mrb[0].mxu0
      %v949 = vpop.f32.mrb[0].mxu0
      %v950 = vadd.f32 %v309, %v949
      %v951 = vpop.f32.mrb[0].mxu0
      %952 = vmatprep.mubr.bf16.mxu0 %v700
      %953 = vmatmul.mubr.bf16.gmra.mrb[0].mxu0 %v531
      %v954 = vpop.f32.mrb[0].mxu0
      %v955 = vadd.f32 %v309, %v954
      %v956 = vpop.f32.mrb[0].mxu0
      %v957 = vpop.f32.mrb[0].mxu0
      %v958 = vadd.f32 %v309, %v957
      %v959 = vpop.f32.mrb[0].mxu0
      %960 = vmatprep.mubr.bf16.mxu0 %v703
      %961 = vmatmul.mubr.bf16.gmra.mrb[0].mxu0 %v533
      %v962 = vpop.f32.mrb[0].mxu0
      %v963 = vadd.f32 %v309, %v962
      %v964 = vpop.f32.mrb[0].mxu0
      %v965 = vpop.f32.mrb[0].mxu0
      %v966 = vadd.f32 %v309, %v965
      %v967 = vpop.f32.mrb[0].mxu0
      %968 = vdwg.mxu0
      %v969 = vmax.f32 %v747, 0.0
      %v970 = vmax.f32 %v750, 0.0
      %v971 = vmax.f32 %v755, 0.0
      %v972 = vmax.f32 %v758, 0.0
      %v973 = vmax.f32 %v763, 0.0
      %v974 = vmax.f32 %v766, 0.0
      %v975 = vmax.f32 %v771, 0.0
      %v976 = vmax.f32 %v774, 0.0
      %v977 = vmax.f32 %v779, 0.0
      %v978 = vmax.f32 %v782, 0.0
      %v979 = vmax.f32 %v787, 0.0
      %v980 = vmax.f32 %v790, 0.0
      %v981 = vmax.f32 %v795, 0.0
      %v982 = vmax.f32 %v798, 0.0
      %v983 = vmax.f32 %v803, 0.0
      %v984 = vmax.f32 %v806, 0.0
      %v985 = vmax.f32 %v811, 0.0
      %v986 = vmax.f32 %v814, 0.0
      %v987 = vmax.f32 %v819, 0.0
      %v988 = vmax.f32 %v822, 0.0
      %v989 = vmax.f32 %v827, 0.0
      %v990 = vmax.f32 %v830, 0.0
      %v991 = vmax.f32 %v835, 0.0
      %v992 = vmax.f32 %v838, 0.0
      %v993 = vmax.f32 %v843, 0.0
      %v994 = vmax.f32 %v846, 0.0
      %v995 = vmax.f32 %v851, 0.0
      %v996 = vmax.f32 %v854, 0.0
      %v997 = vmax.f32 %v859, 0.0
      %v998 = vmax.f32 %v862, 0.0
      %v999 = vmax.f32 %v867, 0.0
      %v1000 = vmax.f32 %v870, 0.0
      %v1001 = vmax.f32 %v875, 0.0
      %v1002 = vmax.f32 %v878, 0.0
      %v1003 = vmax.f32 %v883, 0.0
      %v1004 = vmax.f32 %v886, 0.0
      %v1005 = vmax.f32 %v891, 0.0
      %v1006 = vmax.f32 %v894, 0.0
      %v1007 = vmax.f32 %v899, 0.0
      %v1008 = vmax.f32 %v902, 0.0
      %v1009 = vmax.f32 %v907, 0.0
      %v1010 = vmax.f32 %v910, 0.0
      %v1011 = vmax.f32 %v915, 0.0
      %v1012 = vmax.f32 %v918, 0.0
      %v1013 = vmax.f32 %v923, 0.0
      %v1014 = vmax.f32 %v926, 0.0
      %v1015 = vmax.f32 %v931, 0.0
      %v1016 = vmax.f32 %v934, 0.0
      %v1017 = vmax.f32 %v939, 0.0
      %v1018 = vmax.f32 %v942, 0.0
      %v1019 = vmax.f32 %v947, 0.0
      %v1020 = vmax.f32 %v950, 0.0
      %v1021 = vmax.f32 %v955, 0.0
      %v1022 = vmax.f32 %v958, 0.0
      %v1023 = vmax.f32 %v963, 0.0
      %v1024 = vmax.f32 %v966, 0.0
      %v1025 = vpack.c.bf16 %v970, %v969
      %v1026 = vpack.c.bf16 %v972, %v971
      %v1027 = vpack.c.bf16 %v974, %v973
      %v1028 = vpack.c.bf16 %v976, %v975
      %v1029 = vpack.c.bf16 %v978, %v977
      %v1030 = vpack.c.bf16 %v980, %v979
      %v1031 = vpack.c.bf16 %v982, %v981
      %v1032 = vpack.c.bf16 %v984, %v983
      %v1033 = vpack.c.bf16 %v986, %v985
      %v1034 = vpack.c.bf16 %v988, %v987
      %v1035 = vpack.c.bf16 %v990, %v989
      %v1036 = vpack.c.bf16 %v992, %v991
      %v1037 = vpack.c.bf16 %v994, %v993
      %v1038 = vpack.c.bf16 %v996, %v995
      %v1039 = vpack.c.bf16 %v998, %v997
      %v1040 = vpack.c.bf16 %v1000, %v999
      %v1041 = vpack.c.bf16 %v1002, %v1001
      %v1042 = vpack.c.bf16 %v1004, %v1003
      %v1043 = vpack.c.bf16 %v1006, %v1005
      %v1044 = vpack.c.bf16 %v1008, %v1007
      %v1045 = vpack.c.bf16 %v1010, %v1009
      %v1046 = vpack.c.bf16 %v1012, %v1011
      %v1047 = vpack.c.bf16 %v1014, %v1013
      %v1048 = vpack.c.bf16 %v1016, %v1015
      %v1049 = vpack.c.bf16 %v1018, %v1017
      %v1050 = vpack.c.bf16 %v1020, %v1019
      %v1051 = vpack.c.bf16 %v1022, %v1021
      %v1052 = vpack.c.bf16 %v1024, %v1023
      %v1081 = vunpack.c.l.b16 %v1025
      %v1082 = vunpack.c.h.b16 %v1025
      %v1083 = vunpack.c.l.b16 %v1026
      %v1084 = vunpack.c.h.b16 %v1026
      %v1085 = vunpack.c.l.b16 %v1027
      %v1086 = vunpack.c.h.b16 %v1027
      %v1087 = vunpack.c.l.b16 %v1028
      %v1088 = vunpack.c.h.b16 %v1028
      %v1089 = vunpack.c.l.b16 %v1029
      %v1090 = vunpack.c.h.b16 %v1029
      %v1091 = vunpack.c.l.b16 %v1030
      %v1092 = vunpack.c.h.b16 %v1030
      %v1093 = vunpack.c.l.b16 %v1031
      %v1094 = vunpack.c.h.b16 %v1031
      %v1095 = vunpack.c.l.b16 %v1032
      %v1096 = vunpack.c.h.b16 %v1032
      %v1097 = vunpack.c.l.b16 %v1033
      %v1098 = vunpack.c.h.b16 %v1033
      %v1099 = vunpack.c.l.b16 %v1034
      %v1100 = vunpack.c.h.b16 %v1034
      %v1101 = vunpack.c.l.b16 %v1035
      %v1102 = vunpack.c.h.b16 %v1035
      %v1103 = vunpack.c.l.b16 %v1036
      %v1104 = vunpack.c.h.b16 %v1036
      %v1105 = vunpack.c.l.b16 %v1037
      %v1106 = vunpack.c.h.b16 %v1037
      %v1107 = vunpack.c.l.b16 %v1038
      %v1108 = vunpack.c.h.b16 %v1038
      %v1109 = vunpack.c.l.b16 %v1039
      %v1110 = vunpack.c.h.b16 %v1039
      %v1111 = vunpack.c.l.b16 %v1040
      %v1112 = vunpack.c.h.b16 %v1040
      %v1113 = vunpack.c.l.b16 %v1041
      %v1114 = vunpack.c.h.b16 %v1041
      %v1115 = vunpack.c.l.b16 %v1042
      %v1116 = vunpack.c.h.b16 %v1042
      %v1117 = vunpack.c.l.b16 %v1043
      %v1118 = vunpack.c.h.b16 %v1043
      %v1119 = vunpack.c.l.b16 %v1044
      %v1120 = vunpack.c.h.b16 %v1044
      %v1121 = vunpack.c.l.b16 %v1045
      %v1122 = vunpack.c.h.b16 %v1045
      %v1123 = vunpack.c.l.b16 %v1046
      %v1124 = vunpack.c.h.b16 %v1046
      %v1125 = vunpack.c.l.b16 %v1047
      %v1126 = vunpack.c.h.b16 %v1047
      %v1127 = vunpack.c.l.b16 %v1048
      %v1128 = vunpack.c.h.b16 %v1048
      %v1129 = vunpack.c.l.b16 %v1049
      %v1130 = vunpack.c.h.b16 %v1049
      %v1131 = vunpack.c.l.b16 %v1050
      %v1132 = vunpack.c.h.b16 %v1050
      %v1133 = vunpack.c.l.b16 %v1051
      %v1134 = vunpack.c.h.b16 %v1051
      %v1135 = vunpack.c.l.b16 %v1052
      %v1136 = vunpack.c.h.b16 %v1052
      %v1137 = vpack.c.b16 %v1081, %v1081
      %v1138 = vpack.c.b16 %v1082, %v1082
      %v1139 = vpack.c.b16 %v1083, %v1083
      %v1140 = vpack.c.b16 %v1084, %v1084
      %v1141 = vpack.c.b16 %v1085, %v1085
      %v1142 = vpack.c.b16 %v1086, %v1086
      %v1143 = vpack.c.b16 %v1087, %v1087
      %v1144 = vpack.c.b16 %v1088, %v1088
      %v1145 = vpack.c.b16 %v1089, %v1089
      %v1146 = vpack.c.b16 %v1090, %v1090
      %v1147 = vpack.c.b16 %v1091, %v1091
      %v1148 = vpack.c.b16 %v1092, %v1092
      %v1149 = vpack.c.b16 %v1093, %v1093
      %v1150 = vpack.c.b16 %v1094, %v1094
      %v1151 = vpack.c.b16 %v1095, %v1095
      %v1152 = vpack.c.b16 %v1096, %v1096
      %v1153 = vpack.c.b16 %v1097, %v1097
      %v1154 = vpack.c.b16 %v1098, %v1098
      %v1155 = vpack.c.b16 %v1099, %v1099
      %v1156 = vpack.c.b16 %v1100, %v1100
      %v1157 = vpack.c.b16 %v1101, %v1101
      %v1158 = vpack.c.b16 %v1102, %v1102
      %v1159 = vpack.c.b16 %v1103, %v1103
      %v1160 = vpack.c.b16 %v1104, %v1104
      %v1161 = vpack.c.b16 %v1105, %v1105
      %v1162 = vpack.c.b16 %v1106, %v1106
      %v1163 = vpack.c.b16 %v1107, %v1107
      %v1164 = vpack.c.b16 %v1108, %v1108
      %v1165 = vpack.c.b16 %v1109, %v1109
      %v1166 = vpack.c.b16 %v1110, %v1110
      %v1167 = vpack.c.b16 %v1111, %v1111
      %v1168 = vpack.c.b16 %v1112, %v1112
      %v1169 = vpack.c.b16 %v1113, %v1113
      %v1170 = vpack.c.b16 %v1114, %v1114
      %v1171 = vpack.c.b16 %v1115, %v1115
      %v1172 = vpack.c.b16 %v1116, %v1116
      %v1173 = vpack.c.b16 %v1117, %v1117
      %v1174 = vpack.c.b16 %v1118, %v1118
      %v1175 = vpack.c.b16 %v1119, %v1119
      %v1176 = vpack.c.b16 %v1120, %v1120
      %v1177 = vpack.c.b16 %v1121, %v1121
      %v1178 = vpack.c.b16 %v1122, %v1122
      %v1179 = vpack.c.b16 %v1123, %v1123
      %v1180 = vpack.c.b16 %v1124, %v1124
      %v1181 = vpack.c.b16 %v1125, %v1125
      %v1182 = vpack.c.b16 %v1126, %v1126
      %v1183 = vpack.c.b16 %v1127, %v1127
      %v1184 = vpack.c.b16 %v1128, %v1128
      %v1185 = vpack.c.b16 %v1129, %v1129
      %v1186 = vpack.c.b16 %v1130, %v1130
      %v1187 = vpack.c.b16 %v1131, %v1131
      %v1188 = vpack.c.b16 %v1132, %v1132
      %v1189 = vpack.c.b16 %v1133, %v1133
      %v1190 = vpack.c.b16 %v1134, %v1134
      %v1191 = vpack.c.b16 %v1135, %v1135
      %v1192 = vpack.c.b16 %v1136, %v1136
      %vm1249 = vcmask 519168
      %1250 = vst.msk [vmem:[%s226] sm:$0xf] %vm1249, %v1137
      %1251 = vst.msk [vmem:[%s226 + $0x4] sm:$0xf] %vm1249, %v1138
      %1252 = vst.msk [vmem:[%s226 + $0x8] sm:$0xf] %vm1249, %v1139
      %1253 = vst.msk [vmem:[%s226 + $0xc] sm:$0xf] %vm1249, %v1140
      %1254 = vst.msk [vmem:[%s226 + $0x10] sm:$0xf] %vm1249, %v1141
      %1255 = vst.msk [vmem:[%s226 + $0x14] sm:$0xf] %vm1249, %v1142
      %1256 = vst.msk [vmem:[%s226 + $0x18] sm:$0xf] %vm1249, %v1143
      %1257 = vst.msk [vmem:[%s226 + $0x1c] sm:$0xf] %vm1249, %v1144
      %1258 = vst.msk [vmem:[%s226 + $0x20] sm:$0xf] %vm1249, %v1145
      %1259 = vst.msk [vmem:[%s226 + $0x24] sm:$0xf] %vm1249, %v1146
      %1260 = vst.msk [vmem:[%s226 + $0x28] sm:$0xf] %vm1249, %v1147
      %1261 = vst.msk [vmem:[%s226 + $0x2c] sm:$0xf] %vm1249, %v1148
      %1262 = vst.msk [vmem:[%s226 + $0x30] sm:$0xf] %vm1249, %v1149
      %1263 = vst.msk [vmem:[%s226 + $0x34] sm:$0xf] %vm1249, %v1150
      %1264 = vst.msk [vmem:[%s226 + $0x38] sm:$0xf] %vm1249, %v1151
      %1265 = vst.msk [vmem:[%s226 + $0x3c] sm:$0xf] %vm1249, %v1152
      %1266 = vst.msk [vmem:[%s226 + $0x40] sm:$0xf] %vm1249, %v1153
      %1267 = vst.msk [vmem:[%s226 + $0x44] sm:$0xf] %vm1249, %v1154
      %1268 = vst.msk [vmem:[%s226 + $0x48] sm:$0xf] %vm1249, %v1155
      %1269 = vst.msk [vmem:[%s226 + $0x4c] sm:$0xf] %vm1249, %v1156
      %1270 = vst.msk [vmem:[%s226 + $0x50] sm:$0xf] %vm1249, %v1157
      %1271 = vst.msk [vmem:[%s226 + $0x54] sm:$0xf] %vm1249, %v1158
      %1272 = vst.msk [vmem:[%s226 + $0x58] sm:$0xf] %vm1249, %v1159
      %1273 = vst.msk [vmem:[%s226 + $0x5c] sm:$0xf] %vm1249, %v1160
      %1274 = vst.msk [vmem:[%s226 + $0x60] sm:$0xf] %vm1249, %v1161
      %1275 = vst.msk [vmem:[%s226 + $0x64] sm:$0xf] %vm1249, %v1162
      %1276 = vst.msk [vmem:[%s226 + $0x68] sm:$0xf] %vm1249, %v1163
      %1277 = vst.msk [vmem:[%s226 + $0x6c] sm:$0xf] %vm1249, %v1164
      %1278 = vst.msk [vmem:[%s226 + $0x70] sm:$0xf] %vm1249, %v1165
      %1279 = vst.msk [vmem:[%s226 + $0x74] sm:$0xf] %vm1249, %v1166
      %1280 = vst.msk [vmem:[%s226 + $0x78] sm:$0xf] %vm1249, %v1167
      %1281 = vst.msk [vmem:[%s226 + $0x7c] sm:$0xf] %vm1249, %v1168
      %1282 = vst.msk [vmem:[%s226 + $0x80] sm:$0xf] %vm1249, %v1169
      %1283 = vst.msk [vmem:[%s226 + $0x84] sm:$0xf] %vm1249, %v1170
      %1284 = vst.msk [vmem:[%s226 + $0x88] sm:$0xf] %vm1249, %v1171
      %1285 = vst.msk [vmem:[%s226 + $0x8c] sm:$0xf] %vm1249, %v1172
      %1286 = vst.msk [vmem:[%s226 + $0x90] sm:$0xf] %vm1249, %v1173
      %1287 = vst.msk [vmem:[%s226 + $0x94] sm:$0xf] %vm1249, %v1174
      %1288 = vst.msk [vmem:[%s226 + $0x98] sm:$0xf] %vm1249, %v1175
      %1289 = vst.msk [vmem:[%s226 + $0x9c] sm:$0xf] %vm1249, %v1176
      %1290 = vst.msk [vmem:[%s226 + $0xa0] sm:$0xf] %vm1249, %v1177
      %1291 = vst.msk [vmem:[%s226 + $0xa4] sm:$0xf] %vm1249, %v1178
      %1292 = vst.msk [vmem:[%s226 + $0xa8] sm:$0xf] %vm1249, %v1179
      %1293 = vst.msk [vmem:[%s226 + $0xac] sm:$0xf] %vm1249, %v1180
      %1294 = vst.msk [vmem:[%s226 + $0xb0] sm:$0xf] %vm1249, %v1181
      %1295 = vst.msk [vmem:[%s226 + $0xb4] sm:$0xf] %vm1249, %v1182
      %1296 = vst.msk [vmem:[%s226 + $0xb8] sm:$0xf] %vm1249, %v1183
      %1297 = vst.msk [vmem:[%s226 + $0xbc] sm:$0xf] %vm1249, %v1184
      %1298 = vst.msk [vmem:[%s226 + $0xc0] sm:$0xf] %vm1249, %v1185
      %1299 = vst.msk [vmem:[%s226 + $0xc4] sm:$0xf] %vm1249, %v1186
      %1300 = vst.msk [vmem:[%s226 + $0xc8] sm:$0xf] %vm1249, %v1187
      %1301 = vst.msk [vmem:[%s226 + $0xcc] sm:$0xf] %vm1249, %v1188
      %1302 = vst.msk [vmem:[%s226 + $0xd0] sm:$0xf] %vm1249, %v1189
      %1303 = vst.msk [vmem:[%s226 + $0xd4] sm:$0xf] %vm1249, %v1190
      %1304 = vst.msk [vmem:[%s226 + $0xd8] sm:$0xf] %vm1249, %v1191
      %1305 = vst.msk [vmem:[%s226 + $0xdc] sm:$0xf] %vm1249, %v1192
      %s1306 = smul.u32 56, %s18
      %p1307 = scmp.lt.s32.totalorder %s1306, 783
      %s1308 = scalar_select %p1307, %s1306, 783
      %p1309 = scmp.lt.s32.totalorder %s19, 0
      %s1310 = scalar_select %p1309, %s19, 0
      %s1311 = sadd.s32 %s1310, %s1308
      %s1312 = smul.addr %s1311, 4
      %s1313 = scalar_lea.vmem %s3, %s1312
      // Predicated region
      $region33: #{tpu_custom_call.1} parent=31 // pred_check
        %p1314 = pneg %p124
      $region34: #{tpu_custom_call.1} parent=31 // pred_check_branch
        %1316 = sbr.rel (%p1314) target = $region36
      $region35: #{tpu_custom_call.1} parent=31 // pred_region
        %s1317 = smul.u32 56, %s18
      $region36: #{tpu_custom_call.1} parent=31 // pred_fallthru
        _
    $region32: #{tpu_custom_call.1} parent=5 // pred_fallthru
      _
    %p1318 = scmp.le.s32.totalorder 2, %s9
    // Predicated region
    $region37: #{tpu_custom_call.1} parent=5 // pred_check
      %p1319 = pneg %p1318
    $region38: #{tpu_custom_call.1} parent=5 // pred_check_branch
      %1321 = sbr.rel (%p1319) target = $region40
    $region39: #{tpu_custom_call.1} parent=5 // pred_region
      %s1322 = ssub.s32 %s9, 2
      // Predicated region
      $region41: #{tpu_custom_call.1} parent=39 // pred_check
        %p1323 = pneg %p130
      $region42: #{tpu_custom_call.1} parent=39 // pred_check_branch
        %1325 = sbr.rel (%p1323) target = $region44
      $region43: #{tpu_custom_call.1} parent=39 // pred_region
        %s1326 = smul.u32 56, %s20
        %p1327 = scmp.lt.s32.totalorder %s1326, 783
        %s1328 = scalar_select %p1327, %s1326, 783
        %p1329 = scmp.lt.s32.totalorder %s21, 0
        %s1330 = scalar_select %p1329, %s21, 0
        %s1331 = sadd.s32 %s1330, %s1328
        %s1332 = smul.addr %s1331, 4
        %s1333 = scalar_lea.vmem %s3, %s1332
      $region44: #{tpu_custom_call.1} parent=39 // pred_fallthru
        _
    $region40: #{tpu_custom_call.1} parent=5 // pred_fallthru
      _
  $region6: #{tpu_custom_call.1} parent=0 // loop_footer
    %s13 = sadd.s32 1, %s9
  $region7: #{tpu_custom_call.1} parent=0 // loop_footer_branch
    %8 = sbr.rel target = $region3
  $region8: #{tpu_custom_call.1} parent=0 // loop_exit
    _

</llo_original>
